<compile_context>
chip_gen: v5e
topology: v5e:2x2
jax: 0.10.0
libtpu: 0.0.40
codegen_flags: <defaults>
</compile_context>

<pallas_src>
import functools

import jax
import jax.numpy as jnp
import numpy as np
from jax.experimental import pallas as pl
from jax.experimental.pallas import tpu as pltpu


def _round_up(x, m):
    return (x + m - 1) // m * m


def _pick_vmem_limit_bytes():
    """VMEM limit = device capacity - 16 MiB headroom, capped at 112 MiB.

    v5e/v6e (128 MiB) -> 112 MiB; v7x (64 MiB/TC) -> 48 MiB.  Falls back to a
    conservative 48 MiB if the hardware query is unavailable.
    """
    fallback = 48 * 1024 * 1024
    try:
        cap = int(pltpu.get_tpu_info().vmem_capacity_bytes)
    except Exception:
        return fallback
    return int(max(32 * 1024 * 1024, min(cap - 16 * 1024 * 1024, 112 * 1024 * 1024)))


def _fsmn_kernel(x_ref, wl_ref, bl_ref, wp_ref, wk_ref, o_ref, halo_ref, *, lorder):
    """One (batch-block, time-tile) grid step.

    x_ref   : (Bb, tT, Dp) f32    input tile
    wl_ref  : (Dp, Hp)            linear weight (x @ W form), matmul dtype
    bl_ref  : (1, Hp)  f32        linear bias
    wp_ref  : (Hp, Dp)            projection weight (f1 @ W form), matmul dtype
    wk_ref  : (lorder, Dp) f32    FIR taps, wk[k, d] = conv_w[d, 0, k, 0]
    o_ref   : (Bb, tT, Dp) f32    output tile
    halo_ref: (Bb*Lh, Dp)  f32    scratch; rows [b*Lh, (b+1)*Lh) hold the last
                                  Lh rows of batch element b's previous-tile p1.

    Carried-halo assumption: on each core the time axis (grid axis 1,
    "arbitrary") iterates innermost and in order for a fixed batch block, and
    the halo is reset at t_idx == 0, so batch blocks never interleave with a
    stale halo.  This matches Mosaic's per-core lexicographic grid order.
    """
    bb, tt, dp = x_ref.shape
    m = bb * tt
    L = lorder
    t_idx = pl.program_id(1)
    mm_dtype = wl_ref.dtype

    x = x_ref[...].reshape(m, dp)                          # (M, Dp) f32

    # ---- MXU path: Linear + ReLU + Project (f32 accumulation) ----
    f1 = jnp.dot(x.astype(mm_dtype), wl_ref[...],
                 preferred_element_type=jnp.float32) + bl_ref[...]
    f1 = jnp.maximum(f1, 0.0)                              # (M, Hp) f32
    p1 = jnp.dot(f1.astype(mm_dtype), wp_ref[...],
                 preferred_element_type=jnp.float32)       # (M, Dp) f32

    # ---- causal depthwise FIR over time ----
    # conv[t, d] = sum_k wk[k, d] * p1_full[t + k - (L-1), d]; p1_full extends
    # (L-1) rows into the previous time tile (zeros before global t == 0).
    wk = wk_ref[...]                                       # (L, Dp) f32
    acc = p1 * wk[L - 1:L, :]                              # tap k = L-1 (shift 0)

    if L > 1:
        Lh = halo_ref.shape[0] // bb                       # halo rows per batch elem
        mh = bb * Lh

        @pl.when(t_idx == 0)
        def _():
            halo_ref[...] = jnp.zeros_like(halo_ref)       # causal zero history

        halo = halo_ref[...]                               # (Bb*Lh, Dp) f32
        # Batch-local time-index columns; lane-broadcast inside the selects.
        t_local = jax.lax.broadcasted_iota(jnp.int32, (bb, tt, 1), 1).reshape(m, 1)
        t_halo = jax.lax.broadcasted_iota(jnp.int32, (bb, Lh, 1), 1).reshape(mh, 1)

        corr = jnp.zeros((mh, dp), jnp.float32)
        for k in range(L - 1):                             # static, unrolled
            s = L - 1 - k                                  # time shift of tap k
            wk_k = wk[k:k + 1, :]
            # In-tile contribution: p1[t - s] for rows with t_local >= s.
            cur = pltpu.roll(p1, shift=s % m, axis=0)
            acc = acc + jnp.where(t_local >= s, cur, 0.0) * wk_k
            # Cross-tile contribution (rows t_local < s only): halo[Lh - s + t].
            hrow = pltpu.roll(halo, shift=(mh - Lh + s) % mh, axis=0)
            corr = corr + jnp.where(t_halo < s, hrow, 0.0) * wk_k

        # Carry the last Lh rows of each batch element's p1 to the next tile.
        halo_ref[...] = p1.reshape(bb, tt, dp)[:, tt - Lh:, :].reshape(mh, dp)

        out3 = (x + p1 + acc).reshape(bb, tt, dp)
        o_ref[...] = out3
        # Tiny boundary fix-up on the first Lh rows of each batch element.
        o_ref[:, :Lh, :] = out3[:, :Lh, :] + corr.reshape(bb, Lh, dp)
    else:
        o_ref[...] = (x + p1 + acc).reshape(bb, tt, dp)


def uni_deep_fsmn(x, w_linear, b_linear, w_project, w_conv, *, lorder,
                  matmul_dtype=jnp.bfloat16, t_tile=512, target_rows=1024):
    """x: (B, T, D) float32. Returns (B, T, D) float32."""
    B, T, D = x.shape
    H = w_linear.shape[0]
    if w_project.shape[0] != D:
        raise ValueError("residual connection requires input_dim == output_dim")

    # Lane-dense padding of the feature axes.
    Dp = _round_up(D, 128)
    Hp = _round_up(H, 128)

    # Halo rows carried across time tiles (sublane-aligned).
    Lh = _round_up(max(lorder - 1, 1), 8)

    # Time tiling and batch blocking.
    tT = min(t_tile, _round_up(T, 8))
    tT = max(tT, Lh)                        # previous tile must cover the FIR reach
    Tp = _round_up(T, tT)
    Bb = max(1, min(B, target_rows // tT))
    if B >= 2:
        Bb = min(Bb, (B + 1) // 2)          # keep grid[0] >= 2 -> both v7x TCs busy
    Bp = _round_up(B, Bb)
    assert tT >= Lh

    f32 = jnp.float32
    xp = x.astype(f32)
    if (Bp, Tp, Dp) != (B, T, D):           # pad only when actually needed
        xp = jnp.pad(xp, ((0, Bp - B), (0, Tp - T), (0, Dp - D)))
    wl = jnp.zeros((Dp, Hp), f32).at[:D, :H].set(w_linear.T).astype(matmul_dtype)
    bl = jnp.zeros((1, Hp), f32).at[0, :H].set(b_linear)
    wp = jnp.zeros((Hp, Dp), f32).at[:H, :D].set(w_project.T).astype(matmul_dtype)
    wk = jnp.zeros((lorder, Dp), f32).at[:, :D].set(w_conv[:, 0, :, 0].T)

    grid = (Bp // Bb, Tp // tT)
    kernel = functools.partial(_fsmn_kernel, lorder=lorder)

    mm_bytes = jnp.dtype(matmul_dtype).itemsize
    cost = pl.CostEstimate(
        flops=int(4 * Bp * Tp * Dp * Hp + 2 * Bp * Tp * Dp * lorder),
        transcendentals=0,
        bytes_accessed=int(2 * Bp * Tp * Dp * 4 + 2 * Dp * Hp * mm_bytes
                           + Hp * 4 + lorder * Dp * 4),
    )

    out = pl.pallas_call(
        kernel,
        out_shape=jax.ShapeDtypeStruct((Bp, Tp, Dp), f32),
        grid_spec=pltpu.PrefetchScalarGridSpec(
            num_scalar_prefetch=0,
            grid=grid,
            in_specs=[
                pl.BlockSpec((Bb, tT, Dp), lambda b, t: (b, t, 0)),
                # Constant block index -> fetched once, stays resident.
                pl.BlockSpec((Dp, Hp), lambda b, t: (0, 0)),
                pl.BlockSpec((1, Hp), lambda b, t: (0, 0)),
                pl.BlockSpec((Hp, Dp), lambda b, t: (0, 0)),
                pl.BlockSpec((lorder, Dp), lambda b, t: (0, 0)),
            ],
            out_specs=pl.BlockSpec((Bb, tT, Dp), lambda b, t: (b, t, 0)),
            scratch_shapes=[pltpu.VMEM((Bb * Lh, Dp), f32)],
        ),
        compiler_params=pltpu.CompilerParams(
            dimension_semantics=("parallel", "arbitrary"),
            vmem_limit_bytes=_pick_vmem_limit_bytes(),
        ),
        cost_estimate=cost,
    )(xp, wl, bl, wp, wk)

    if (Bp, Tp, Dp) != (B, T, D):
        out = out[:B, :T, :D]
    return out


def uni_deep_fsmn_ref(x, w_linear, b_linear, w_project, w_conv, *, lorder):
    """Pure-JAX reference matching the PyTorch forward."""
    B, T, D = x.shape
    f1 = jax.nn.relu(jnp.einsum("btd,hd->bth", x, w_linear) + b_linear)
    p1 = jnp.einsum("bth,dh->btd", f1, w_project)
    wk = w_conv[:, 0, :, 0]                      # (D, lorder)
    p1_pad = jnp.pad(p1, ((0, 0), (lorder - 1, 0), (0, 0)))
    conv = jnp.zeros_like(p1)
    for k in range(lorder):
        conv = conv + p1_pad[:, k:k + T, :] * wk[:, k][None, None, :]
    return x + p1 + conv


if __name__ == "__main__":
    # Small shapes consistent with the module (residual needs in_dim == out_dim).
    B, T = 4, 16
    input_dim = output_dim = 32
    hidden_size = 64
    lorder = 5

    key = jax.random.PRNGKey(0)
    k_x, k_wl, k_bl, k_wp, k_wc = jax.random.split(key, 5)

    x = jax.random.normal(k_x, (B, T, input_dim), dtype=jnp.float32)
    # nn.Linear(input_dim, hidden_size): weight (H, D), bias (H,)
    w_linear = jax.random.normal(k_wl, (hidden_size, input_dim), jnp.float32) * 0.1
    b_linear = jax.random.normal(k_bl, (hidden_size,), jnp.float32) * 0.1
    # nn.Linear(hidden_size, output_dim, bias=False): weight (D_out, H)
    w_project = jax.random.normal(k_wp, (output_dim, hidden_size), jnp.float32) * 0.1
    # nn.Conv2d(D, D, [lorder, 1], groups=D, bias=False): weight (D, 1, lorder, 1)
    w_conv = jax.random.normal(k_wc, (output_dim, 1, lorder, 1), jnp.float32) * 0.1

    ref = np.asarray(jax.block_until_ready(
        uni_deep_fsmn_ref(x, w_linear, b_linear, w_project, w_conv, lorder=lorder)))

    # 1) f32 matmuls, default tiling (Bb=2 -> multi-batch flattened tile).
    out = uni_deep_fsmn(x, w_linear, b_linear, w_project, w_conv, lorder=lorder,
                        matmul_dtype=jnp.float32)
    out = np.asarray(jax.block_until_ready(out))
    np.testing.assert_allclose(out, ref, rtol=1e-4, atol=1e-4)

    # 2) f32 matmuls, forced T tiling -> exercises the carried p1 halo + fix-up.
    out = uni_deep_fsmn(x, w_linear, b_linear, w_project, w_conv, lorder=lorder,
                        matmul_dtype=jnp.float32, t_tile=8)
    out = np.asarray(jax.block_until_ready(out))
    np.testing.assert_allclose(out, ref, rtol=1e-4, atol=1e-4)

    # 3) f32 matmuls, Bb=1 batch blocks + T tiling -> halo reset per batch block.
    out = uni_deep_fsmn(x, w_linear, b_linear, w_project, w_conv, lorder=lorder,
                        matmul_dtype=jnp.float32, t_tile=8, target_rows=8)
    out = np.asarray(jax.block_until_ready(out))
    np.testing.assert_allclose(out, ref, rtol=1e-4, atol=1e-4)

    # 4) bf16 matmul operands (perf path on v6e/v7x), f32 accumulation/elementwise.
    out = uni_deep_fsmn(x, w_linear, b_linear, w_project, w_conv, lorder=lorder,
                        matmul_dtype=jnp.bfloat16, t_tile=8)
    out = np.asarray(jax.block_until_ready(out))
    np.testing.assert_allclose(out, ref, rtol=5e-2, atol=5e-2)

    print("KERNEL_OK")
</pallas_src>

<mosaic_0001>
module attributes {stable_mosaic.version = 11 : i64} {
  func.func @_fsmn_kernel(%arg0: i32, %arg1: i32, %arg2: memref<2x16x128xf32, #tpu.memory_space<vmem>>, %arg3: memref<128x128xf32, #tpu.memory_space<vmem>>, %arg4: memref<1x128xf32, #tpu.memory_space<vmem>>, %arg5: memref<128x128xf32, #tpu.memory_space<vmem>>, %arg6: memref<5x128xf32, #tpu.memory_space<vmem>>, %arg7: memref<2x16x128xf32, #tpu.memory_space<vmem>>, %arg8: memref<16x128xf32, #tpu.memory_space<vmem>>) attributes {dimension_semantics = [#tpu.dimension_semantics<parallel>, #tpu.dimension_semantics<arbitrary>], iteration_bounds = array<i64: 2, 1>, scalar_prefetch = 0 : i64, scratch_operands = 1 : i64, tpu.core_type = #tpu.core_type<tc>, window_params = [{transform_indices = @transform_0, window_bounds = array<i64: 2, 16, 128>}, {pipeline_mode = #tpu.pipeline_mode<synchronous>, transform_indices = @transform_1, window_bounds = array<i64: 128, 128>}, {pipeline_mode = #tpu.pipeline_mode<synchronous>, transform_indices = @transform_2, window_bounds = array<i64: 1, 128>}, {pipeline_mode = #tpu.pipeline_mode<synchronous>, transform_indices = @transform_3, window_bounds = array<i64: 128, 128>}, {pipeline_mode = #tpu.pipeline_mode<synchronous>, transform_indices = @transform_4, window_bounds = array<i64: 5, 128>}, {transform_indices = @transform_5, window_bounds = array<i64: 2, 16, 128>}]} {
    %c0 = arith.constant 0 : index
    %c0_0 = arith.constant 0 : index
    %c0_1 = arith.constant 0 : index
    %0 = vector.load %arg2[%c0, %c0_0, %c0_1] : memref<2x16x128xf32, #tpu.memory_space<vmem>>, vector<2x16x128xf32>
    %1 = vector.shape_cast %0 : vector<2x16x128xf32> to vector<32x128xf32>
    %c0_2 = arith.constant 0 : index
    %c0_3 = arith.constant 0 : index
    %2 = vector.load %arg3[%c0_2, %c0_3] : memref<128x128xf32, #tpu.memory_space<vmem>>, vector<128x128xf32>
    %cst = arith.constant dense<0.000000e+00> : vector<32x128xf32>
    %3 = tpu.matmul %1, %2, %cst {dimension_numbers = #tpu.dot_dimension_numbers<[1], [0], [0], [1], [0, 0, 1, 1], [], []>} : vector<32x128xf32>, vector<128x128xf32>, vector<32x128xf32> -> vector<32x128xf32>
    %c0_4 = arith.constant 0 : index
    %c0_5 = arith.constant 0 : index
    %4 = vector.load %arg4[%c0_4, %c0_5] : memref<1x128xf32, #tpu.memory_space<vmem>>, vector<1x128xf32>
    %5 = vector.broadcast %4 : vector<1x128xf32> to vector<32x128xf32>
    %6 = arith.addf %3, %5 : vector<32x128xf32>
    %cst_6 = arith.constant 0.000000e+00 : f32
    %7 = vector.broadcast %cst_6 : f32 to vector<32x128xf32>
    %8 = arith.maximumf %6, %7 : vector<32x128xf32>
    %c0_7 = arith.constant 0 : index
    %c0_8 = arith.constant 0 : index
    %9 = vector.load %arg5[%c0_7, %c0_8] : memref<128x128xf32, #tpu.memory_space<vmem>>, vector<128x128xf32>
    %cst_9 = arith.constant dense<0.000000e+00> : vector<32x128xf32>
    %10 = tpu.matmul %8, %9, %cst_9 {dimension_numbers = #tpu.dot_dimension_numbers<[1], [0], [0], [1], [0, 0, 1, 1], [], []>} : vector<32x128xf32>, vector<128x128xf32>, vector<32x128xf32> -> vector<32x128xf32>
    %c0_10 = arith.constant 0 : index
    %c0_11 = arith.constant 0 : index
    %11 = vector.load %arg6[%c0_10, %c0_11] : memref<5x128xf32, #tpu.memory_space<vmem>>, vector<5x128xf32>
    %12 = vector.extract_strided_slice %11 {offsets = [4, 0], sizes = [1, 128], strides = [1, 1]} : vector<5x128xf32> to vector<1x128xf32>
    %13 = vector.broadcast %12 : vector<1x128xf32> to vector<32x128xf32>
    %14 = arith.mulf %10, %13 : vector<32x128xf32>
    %c0_i32 = arith.constant 0 : i32
    %15 = arith.cmpi eq, %arg1, %c0_i32 : i32
    %16 = arith.extui %15 : i1 to i32
    %c0_i32_12 = arith.constant 0 : i32
    %17 = arith.cmpi ne, %16, %c0_i32_12 : i32
    scf.if %17 {
      %cst_40 = arith.constant 0.000000e+00 : f32
      %120 = vector.broadcast %cst_40 : f32 to vector<16x128xf32>
      %c0_41 = arith.constant 0 : index
      %c0_42 = arith.constant 0 : index
      %121 = vector.load %arg8[%c0_41, %c0_42] : memref<16x128xf32, #tpu.memory_space<vmem>>, vector<16x128xf32>
      tpu.vector_store %arg8[%c0_41, %c0_42], %120 {strides = array<i32>} : memref<16x128xf32, #tpu.memory_space<vmem>>, vector<16x128xf32>,
    } else {
    }
    %c0_13 = arith.constant 0 : index
    %c0_14 = arith.constant 0 : index
    %18 = vector.load %arg8[%c0_13, %c0_14] : memref<16x128xf32, #tpu.memory_space<vmem>>, vector<16x128xf32>
    %19 = tpu.iota {dimensions = array<i32: 1>} : vector<2x16x1xi32>
    %20 = vector.shape_cast %19 : vector<2x16x1xi32> to vector<32x1xi32>
    %21 = tpu.iota {dimensions = array<i32: 1>} : vector<2x8x1xi32>
    %22 = vector.shape_cast %21 : vector<2x8x1xi32> to vector<16x1xi32>
    %cst_15 = arith.constant 0.000000e+00 : f32
    %23 = vector.broadcast %cst_15 : f32 to vector<16x128xf32>
    %24 = vector.extract_strided_slice %11 {offsets = [0, 0], sizes = [1, 128], strides = [1, 1]} : vector<5x128xf32> to vector<1x128xf32>
    %c4_i32 = arith.constant 4 : i32
    %25 = tpu.dynamic_rotate %10 by %c4_i32 dim 0 : vector<32x128xf32>, i32 -> vector<32x128xf32>
    %c4_i32_16 = arith.constant 4 : i32
    %26 = vector.broadcast %c4_i32_16 : i32 to vector<32x1xi32>
    %27 = arith.cmpi sge, %20, %26 : vector<32x1xi32>
    %cst_17 = arith.constant 0.000000e+00 : f32
    %28 = vector.shape_cast %27 : vector<32x1xi1> to vector<32x1xi1>
    %29 = vector.broadcast %28 : vector<32x1xi1> to vector<32x128xi1>
    %30 = vector.broadcast %cst_17 : f32 to vector<32x128xf32>
    %31 = arith.select %29, %25, %30 : vector<32x128xi1>, vector<32x128xf32>
    %32 = vector.broadcast %24 : vector<1x128xf32> to vector<32x128xf32>
    %33 = arith.mulf %31, %32 : vector<32x128xf32>
    %34 = arith.addf %14, %33 : vector<32x128xf32>
    %c12_i32 = arith.constant 12 : i32
    %35 = tpu.dynamic_rotate %18 by %c12_i32 dim 0 : vector<16x128xf32>, i32 -> vector<16x128xf32>
    %c4_i32_18 = arith.constant 4 : i32
    %36 = vector.broadcast %c4_i32_18 : i32 to vector<16x1xi32>
    %37 = arith.cmpi slt, %22, %36 : vector<16x1xi32>
    %cst_19 = arith.constant 0.000000e+00 : f32
    %38 = vector.shape_cast %37 : vector<16x1xi1> to vector<16x1xi1>
    %39 = vector.broadcast %38 : vector<16x1xi1> to vector<16x128xi1>
    %40 = vector.broadcast %cst_19 : f32 to vector<16x128xf32>
    %41 = arith.select %39, %35, %40 : vector<16x128xi1>, vector<16x128xf32>
    %42 = vector.broadcast %24 : vector<1x128xf32> to vector<16x128xf32>
    %43 = arith.mulf %41, %42 : vector<16x128xf32>
    %44 = arith.addf %23, %43 : vector<16x128xf32>
    %45 = vector.extract_strided_slice %11 {offsets = [1, 0], sizes = [1, 128], strides = [1, 1]} : vector<5x128xf32> to vector<1x128xf32>
    %c3_i32 = arith.constant 3 : i32
    %46 = tpu.dynamic_rotate %10 by %c3_i32 dim 0 : vector<32x128xf32>, i32 -> vector<32x128xf32>
    %c3_i32_20 = arith.constant 3 : i32
    %47 = vector.broadcast %c3_i32_20 : i32 to vector<32x1xi32>
    %48 = arith.cmpi sge, %20, %47 : vector<32x1xi32>
    %cst_21 = arith.constant 0.000000e+00 : f32
    %49 = vector.shape_cast %48 : vector<32x1xi1> to vector<32x1xi1>
    %50 = vector.broadcast %49 : vector<32x1xi1> to vector<32x128xi1>
    %51 = vector.broadcast %cst_21 : f32 to vector<32x128xf32>
    %52 = arith.select %50, %46, %51 : vector<32x128xi1>, vector<32x128xf32>
    %53 = vector.broadcast %45 : vector<1x128xf32> to vector<32x128xf32>
    %54 = arith.mulf %52, %53 : vector<32x128xf32>
    %55 = arith.addf %34, %54 : vector<32x128xf32>
    %c11_i32 = arith.constant 11 : i32
    %56 = tpu.dynamic_rotate %18 by %c11_i32 dim 0 : vector<16x128xf32>, i32 -> vector<16x128xf32>
    %c3_i32_22 = arith.constant 3 : i32
    %57 = vector.broadcast %c3_i32_22 : i32 to vector<16x1xi32>
    %58 = arith.cmpi slt, %22, %57 : vector<16x1xi32>
    %cst_23 = arith.constant 0.000000e+00 : f32
    %59 = vector.shape_cast %58 : vector<16x1xi1> to vector<16x1xi1>
    %60 = vector.broadcast %59 : vector<16x1xi1> to vector<16x128xi1>
    %61 = vector.broadcast %cst_23 : f32 to vector<16x128xf32>
    %62 = arith.select %60, %56, %61 : vector<16x128xi1>, vector<16x128xf32>
    %63 = vector.broadcast %45 : vector<1x128xf32> to vector<16x128xf32>
    %64 = arith.mulf %62, %63 : vector<16x128xf32>
    %65 = arith.addf %44, %64 : vector<16x128xf32>
    %66 = vector.extract_strided_slice %11 {offsets = [2, 0], sizes = [1, 128], strides = [1, 1]} : vector<5x128xf32> to vector<1x128xf32>
    %c2_i32 = arith.constant 2 : i32
    %67 = tpu.dynamic_rotate %10 by %c2_i32 dim 0 : vector<32x128xf32>, i32 -> vector<32x128xf32>
    %c2_i32_24 = arith.constant 2 : i32
    %68 = vector.broadcast %c2_i32_24 : i32 to vector<32x1xi32>
    %69 = arith.cmpi sge, %20, %68 : vector<32x1xi32>
    %cst_25 = arith.constant 0.000000e+00 : f32
    %70 = vector.shape_cast %69 : vector<32x1xi1> to vector<32x1xi1>
    %71 = vector.broadcast %70 : vector<32x1xi1> to vector<32x128xi1>
    %72 = vector.broadcast %cst_25 : f32 to vector<32x128xf32>
    %73 = arith.select %71, %67, %72 : vector<32x128xi1>, vector<32x128xf32>
    %74 = vector.broadcast %66 : vector<1x128xf32> to vector<32x128xf32>
    %75 = arith.mulf %73, %74 : vector<32x128xf32>
    %76 = arith.addf %55, %75 : vector<32x128xf32>
    %c10_i32 = arith.constant 10 : i32
    %77 = tpu.dynamic_rotate %18 by %c10_i32 dim 0 : vector<16x128xf32>, i32 -> vector<16x128xf32>
    %c2_i32_26 = arith.constant 2 : i32
    %78 = vector.broadcast %c2_i32_26 : i32 to vector<16x1xi32>
    %79 = arith.cmpi slt, %22, %78 : vector<16x1xi32>
    %cst_27 = arith.constant 0.000000e+00 : f32
    %80 = vector.shape_cast %79 : vector<16x1xi1> to vector<16x1xi1>
    %81 = vector.broadcast %80 : vector<16x1xi1> to vector<16x128xi1>
    %82 = vector.broadcast %cst_27 : f32 to vector<16x128xf32>
    %83 = arith.select %81, %77, %82 : vector<16x128xi1>, vector<16x128xf32>
    %84 = vector.broadcast %66 : vector<1x128xf32> to vector<16x128xf32>
    %85 = arith.mulf %83, %84 : vector<16x128xf32>
    %86 = arith.addf %65, %85 : vector<16x128xf32>
    %87 = vector.extract_strided_slice %11 {offsets = [3, 0], sizes = [1, 128], strides = [1, 1]} : vector<5x128xf32> to vector<1x128xf32>
    %c1_i32 = arith.constant 1 : i32
    %88 = tpu.dynamic_rotate %10 by %c1_i32 dim 0 : vector<32x128xf32>, i32 -> vector<32x128xf32>
    %c1_i32_28 = arith.constant 1 : i32
    %89 = vector.broadcast %c1_i32_28 : i32 to vector<32x1xi32>
    %90 = arith.cmpi sge, %20, %89 : vector<32x1xi32>
    %cst_29 = arith.constant 0.000000e+00 : f32
    %91 = vector.shape_cast %90 : vector<32x1xi1> to vector<32x1xi1>
    %92 = vector.broadcast %91 : vector<32x1xi1> to vector<32x128xi1>
    %93 = vector.broadcast %cst_29 : f32 to vector<32x128xf32>
    %94 = arith.select %92, %88, %93 : vector<32x128xi1>, vector<32x128xf32>
    %95 = vector.broadcast %87 : vector<1x128xf32> to vector<32x128xf32>
    %96 = arith.mulf %94, %95 : vector<32x128xf32>
    %97 = arith.addf %76, %96 : vector<32x128xf32>
    %c9_i32 = arith.constant 9 : i32
    %98 = tpu.dynamic_rotate %18 by %c9_i32 dim 0 : vector<16x128xf32>, i32 -> vector<16x128xf32>
    %c1_i32_30 = arith.constant 1 : i32
    %99 = vector.broadcast %c1_i32_30 : i32 to vector<16x1xi32>
    %100 = arith.cmpi slt, %22, %99 : vector<16x1xi32>
    %cst_31 = arith.constant 0.000000e+00 : f32
    %101 = vector.shape_cast %100 : vector<16x1xi1> to vector<16x1xi1>
    %102 = vector.broadcast %101 : vector<16x1xi1> to vector<16x128xi1>
    %103 = vector.broadcast %cst_31 : f32 to vector<16x128xf32>
    %104 = arith.select %102, %98, %103 : vector<16x128xi1>, vector<16x128xf32>
    %105 = vector.broadcast %87 : vector<1x128xf32> to vector<16x128xf32>
    %106 = arith.mulf %104, %105 : vector<16x128xf32>
    %107 = arith.addf %86, %106 : vector<16x128xf32>
    %108 = vector.shape_cast %10 : vector<32x128xf32> to vector<2x16x128xf32>
    %109 = vector.extract_strided_slice %108 {offsets = [0, 8, 0], sizes = [2, 8, 128], strides = [1, 1, 1]} : vector<2x16x128xf32> to vector<2x8x128xf32>
    %110 = vector.shape_cast %109 : vector<2x8x128xf32> to vector<16x128xf32>
    %c0_32 = arith.constant 0 : index
    %c0_33 = arith.constant 0 : index
    %111 = vector.load %arg8[%c0_32, %c0_33] : memref<16x128xf32, #tpu.memory_space<vmem>>, vector<16x128xf32>
    tpu.vector_store %arg8[%c0_32, %c0_33], %110 {strides = array<i32>} : memref<16x128xf32, #tpu.memory_space<vmem>>, vector<16x128xf32>,
    %112 = arith.addf %1, %10 : vector<32x128xf32>
    %113 = arith.addf %112, %97 : vector<32x128xf32>
    %114 = vector.shape_cast %113 : vector<32x128xf32> to vector<2x16x128xf32>
    %c0_34 = arith.constant 0 : index
    %c0_35 = arith.constant 0 : index
    %c0_36 = arith.constant 0 : index
    %115 = vector.load %arg7[%c0_34, %c0_35, %c0_36] : memref<2x16x128xf32, #tpu.memory_space<vmem>>, vector<2x16x128xf32>
    tpu.vector_store %arg7[%c0_34, %c0_35, %c0_36], %114 {strides = array<i32>} : memref<2x16x128xf32, #tpu.memory_space<vmem>>, vector<2x16x128xf32>,
    %116 = vector.extract_strided_slice %114 {offsets = [0, 0, 0], sizes = [2, 8, 128], strides = [1, 1, 1]} : vector<2x16x128xf32> to vector<2x8x128xf32>
    %117 = vector.shape_cast %107 : vector<16x128xf32> to vector<2x8x128xf32>
    %118 = arith.addf %116, %117 : vector<2x8x128xf32>
    %c0_37 = arith.constant 0 : index
    %c0_38 = arith.constant 0 : index
    %c0_39 = arith.constant 0 : index
    %119 = vector.load %arg7[%c0_37, %c0_38, %c0_39] : memref<2x16x128xf32, #tpu.memory_space<vmem>>, vector<2x8x128xf32>
    tpu.vector_store %arg7[%c0_37, %c0_38, %c0_39], %118 {strides = array<i32>} : memref<2x16x128xf32, #tpu.memory_space<vmem>>, vector<2x8x128xf32>,
    return
  }
  func.func @transform_0(%arg0: i32, %arg1: i32) -> (i32, i32, i32) {
    %c0_i32 = arith.constant 0 : i32
    %c0_i32_0 = arith.constant 0 : i32
    return %arg0, %arg1, %c0_i32 : i32, i32, i32
  }
  func.func @transform_1(%arg0: i32, %arg1: i32) -> (i32, i32) {
    %c0_i32 = arith.constant 0 : i32
    %c0_i32_0 = arith.constant 0 : i32
    %c0_i32_1 = arith.constant 0 : i32
    return %c0_i32, %c0_i32_0 : i32, i32
  }
  func.func @transform_2(%arg0: i32, %arg1: i32) -> (i32, i32) {
    %c0_i32 = arith.constant 0 : i32
    %c0_i32_0 = arith.constant 0 : i32
    %c0_i32_1 = arith.constant 0 : i32
    return %c0_i32, %c0_i32_0 : i32, i32
  }
  func.func @transform_3(%arg0: i32, %arg1: i32) -> (i32, i32) {
    %c0_i32 = arith.constant 0 : i32
    %c0_i32_0 = arith.constant 0 : i32
    %c0_i32_1 = arith.constant 0 : i32
    return %c0_i32, %c0_i32_0 : i32, i32
  }
  func.func @transform_4(%arg0: i32, %arg1: i32) -> (i32, i32) {
    %c0_i32 = arith.constant 0 : i32
    %c0_i32_0 = arith.constant 0 : i32
    %c0_i32_1 = arith.constant 0 : i32
    return %c0_i32, %c0_i32_0 : i32, i32
  }
  func.func @transform_5(%arg0: i32, %arg1: i32) -> (i32, i32, i32) {
    %c0_i32 = arith.constant 0 : i32
    %c0_i32_0 = arith.constant 0 : i32
    return %arg0, %arg1, %c0_i32 : i32, i32, i32
  }
}

</mosaic_0001>

<llo_original>
// kernel: tpu_custom_call.1
$region0: #{tpu_custom_call.1}
  #allocation0 [shape = 'u32[]', space=smem, size = 0x4, offset = 0x4, fixed_abs, tag = 'smem constant byte address 0x4 - core index']
  #allocation1 [shape = 'u32[72,128]{1,0:T(1,128)}', space=vmem, size = 0x9000, scoped, tag = 'internal scratch']
  #allocation2 [shape = 'f32[16,128]{1,0:T(8,128)}', space=vmem, size = 0x2000, scoped, tag = 'scratch operand']
  %s0 = inlined_call_operand.hbm [shape: f32[4,16,128], index: 0, kind: input, shape index: {}]
  %s1 = inlined_call_operand.hbm [shape: f32[128,128], index: 1, kind: input, shape index: {}]
  %s2 = inlined_call_operand.vmem [shape: f32[1,128], index: 2, kind: input, shape index: {}]
  %s3 = inlined_call_operand.hbm [shape: f32[128,128], index: 3, kind: input, shape index: {}]
  %s4 = inlined_call_operand.hbm [shape: f32[5,128], index: 4, kind: input, shape index: {}]
  %s5 = inlined_call_operand.hbm [shape: f32[4,16,128], index: 5, kind: output, shape index: {}]
  %s6 = sld [smem:[#allocation0]]
  $region73: #{tpu_custom_call.1} parent=0
    _
  %s8 = ssub.s32 1, %s6
  %s9 = scalar_select 0, %s8, %s6
  $region1: #{tpu_custom_call.1} parent=0
    #allocation3 [shape = 'u8[32768]{0}', space=vmem, size = 0x8000, scoped, tag = 'input window, operand 0']
    #allocation4 [shape = 's32[2]{0}', space=sflag, size = 0x8, scoped, tag = 'scoped memory for tpu_custom_call.1']
    #allocation5 [shape = 's32[2]{0}', space=sflag, size = 0x8, scoped, tag = 'scoped memory for tpu_custom_call.1']
    #allocation6 [shape = 'u8[65536]{0}', space=vmem, size = 0x10000, scoped, tag = 'input window, operand 1, single buffered']
    #allocation7 [shape = 's32[1]{0}', space=sflag, size = 0x4, scoped, tag = 'scoped memory for tpu_custom_call.1']
    #allocation8 [shape = 'u8[65536]{0}', space=vmem, size = 0x10000, scoped, tag = 'input window, operand 3, single buffered']
    #allocation9 [shape = 'u8[4096]{0}', space=vmem, size = 0x1000, scoped, tag = 'input window, operand 4, single buffered']
    #allocation10 [shape = 's32[1]{0}', space=sflag, size = 0x4, scoped, tag = 'scoped memory for tpu_custom_call.1']
    #allocation11 [shape = 'u8[32768]{0}', space=vmem, size = 0x8000, scoped, tag = 'output window, operand 0']
    %10 = vsyncpa [#allocation4], 0
    %s11 = scalar_lea.sflag [#allocation4], 1
    %12 = vsyncpa %s11, 0
    %13 = vsyncpa [#allocation7], 0
    %14 = vsyncpa [#allocation10], 0
    %15 = vsyncpa [#allocation5], 0
    %s16 = scalar_lea.sflag [#allocation5], 1
    %17 = vsyncpa %s16, 0
    loop: start=0, step=1, limit=4
    $region2: #{tpu_custom_call.1} parent=1 // loop_pre_header
      _
    $region3: #{tpu_custom_call.1} parent=1 // loop_header
      %s19 = sphi 0, %s23
      %p20 = scmp.ge.s32.totalorder %s19, 4
      %s26 = sphi 0, %s38
      %s27 = sphi 0, %s34
      %s28 = sphi 0, %s26
      %s29 = sphi 0, %s27
      %s30 = sphi 0, %s28
      %s31 = sphi 0, %s29
      %s43 = sphi 0, %s45
      %s46 = sphi 0, %s43
      %s47 = sphi 0, %s46
      %s63 = sphi 0, %s47
      %s67 = sphi 0, %s67
      %s69 = sphi 0, %s67
      %s70 = sphi 0, %s69
      %s84 = sphi 0, %s70
      %s88 = sphi 0, %s88
      %s90 = sphi 0, %s88
      %s91 = sphi 0, %s90
      %s105 = sphi 0, %s91
      %s109 = sphi 0, %s109
      %s111 = sphi 0, %s109
      %s112 = sphi 0, %s111
      %s126 = sphi 0, %s112
      %s130 = sphi 0, %s130
      %s132 = sphi 0, %s130
      %s133 = sphi 0, %s132
      %s147 = sphi 0, %s133
      %s155 = sphi 0, %s157
      %s158 = sphi 0, %s155
      %s159 = sphi 0, %s158
      %s175 = sphi 0, %s159
    $region4: #{tpu_custom_call.1} parent=1 // loop_header_branch
      %22 = sbr.rel (%p20) target = $region8
    $region5: #{tpu_custom_call.1} parent=1 // loop_body
      %s24 = ssub.s32 %s19, 1
      %s25 = ssub.s32 %s19, 2
      %s32 = sadd.s32 1, %s27
      %p33 = scmp.ge.s32.totalorder %s32, 1
      %s34 = scalar_select %p33, 0, %s32
      %s35 = sadd.s32 1, %s26
      %s36 = scalar_select %p33, %s35, %s26
      %p37 = scmp.ge.s32.totalorder %s36, 2
      %s38 = scalar_select %p37, 0, %s36
      %s39 = ssub.s32 %s26, %s38
      %s40 = ssub.s32 %s27, %s34
      %s41 = sor.u32 %s39, %s40
      %p42 = scmp.eq.s32.totalorder %s41, 0
      %s44 = sadd.s32 %s43, 1
      %s45 = scalar_select %p42, %s43, %s44
      %p48 = pneg %p42
      %p49 = scmp.eq.s32.totalorder %s19, 1
      %p50 = por %p48, %p49
      %p51 = scmp.ne.s32.totalorder %s43, %s46
      %p52 = scmp.eq.s32.totalorder %s19, 0
      %p53 = por %p51, %p52
      %p54 = scmp.ne.s32.totalorder %s43, %s46
      %p55 = scmp.eq.s32.totalorder %s24, 1
      %p56 = por %p54, %p55
      %p57 = scmp.ne.s32.totalorder %s46, %s47
      %p58 = scmp.eq.s32.totalorder %s24, 0
      %p59 = por %p57, %p58
      %p60 = scmp.ne.s32.totalorder %s46, %s47
      %p61 = scmp.eq.s32.totalorder %s25, 1
      %p62 = por %p60, %p61
      %p64 = scmp.ne.s32.totalorder %s47, %s63
      %p65 = scmp.eq.s32.totalorder %s25, 0
      %p66 = por %p64, %p65
      %s68 = sadd.s32 %s67, 1
      %p71 = scmp.eq.s32.totalorder %s19, 1
      %p72 = scmp.ne.s32.totalorder %s67, %s69
      %p73 = scmp.eq.s32.totalorder %s19, 0
      %p74 = por %p72, %p73
      %p75 = scmp.ne.s32.totalorder %s67, %s69
      %p76 = scmp.eq.s32.totalorder %s24, 1
      %p77 = por %p75, %p76
      %p78 = scmp.ne.s32.totalorder %s69, %s70
      %p79 = scmp.eq.s32.totalorder %s24, 0
      %p80 = por %p78, %p79
      %p81 = scmp.ne.s32.totalorder %s69, %s70
      %p82 = scmp.eq.s32.totalorder %s25, 1
      %p83 = por %p81, %p82
      %p85 = scmp.ne.s32.totalorder %s70, %s84
      %p86 = scmp.eq.s32.totalorder %s25, 0
      %p87 = por %p85, %p86
      %s89 = sadd.s32 %s88, 1
      %p92 = scmp.eq.s32.totalorder %s19, 1
      %p93 = scmp.ne.s32.totalorder %s88, %s90
      %p94 = scmp.eq.s32.totalorder %s19, 0
      %p95 = por %p93, %p94
      %p96 = scmp.ne.s32.totalorder %s88, %s90
      %p97 = scmp.eq.s32.totalorder %s24, 1
      %p98 = por %p96, %p97
      %p99 = scmp.ne.s32.totalorder %s90, %s91
      %p100 = scmp.eq.s32.totalorder %s24, 0
      %p101 = por %p99, %p100
      %p102 = scmp.ne.s32.totalorder %s90, %s91
      %p103 = scmp.eq.s32.totalorder %s25, 1
      %p104 = por %p102, %p103
      %p106 = scmp.ne.s32.totalorder %s91, %s105
      %p107 = scmp.eq.s32.totalorder %s25, 0
      %p108 = por %p106, %p107
      %s110 = sadd.s32 %s109, 1
      %p113 = scmp.eq.s32.totalorder %s19, 1
      %p114 = scmp.ne.s32.totalorder %s109, %s111
      %p115 = scmp.eq.s32.totalorder %s19, 0
      %p116 = por %p114, %p115
      %p117 = scmp.ne.s32.totalorder %s109, %s111
      %p118 = scmp.eq.s32.totalorder %s24, 1
      %p119 = por %p117, %p118
      %p120 = scmp.ne.s32.totalorder %s111, %s112
      %p121 = scmp.eq.s32.totalorder %s24, 0
      %p122 = por %p120, %p121
      %p123 = scmp.ne.s32.totalorder %s111, %s112
      %p124 = scmp.eq.s32.totalorder %s25, 1
      %p125 = por %p123, %p124
      %p127 = scmp.ne.s32.totalorder %s112, %s126
      %p128 = scmp.eq.s32.totalorder %s25, 0
      %p129 = por %p127, %p128
      %s131 = sadd.s32 %s130, 1
      %p134 = scmp.eq.s32.totalorder %s19, 1
      %p135 = scmp.ne.s32.totalorder %s130, %s132
      %p136 = scmp.eq.s32.totalorder %s19, 0
      %p137 = por %p135, %p136
      %p138 = scmp.ne.s32.totalorder %s130, %s132
      %p139 = scmp.eq.s32.totalorder %s24, 1
      %p140 = por %p138, %p139
      %p141 = scmp.ne.s32.totalorder %s132, %s133
      %p142 = scmp.eq.s32.totalorder %s24, 0
      %p143 = por %p141, %p142
      %p144 = scmp.ne.s32.totalorder %s132, %s133
      %p145 = scmp.eq.s32.totalorder %s25, 1
      %p146 = por %p144, %p145
      %p148 = scmp.ne.s32.totalorder %s133, %s147
      %p149 = scmp.eq.s32.totalorder %s25, 0
      %p150 = por %p148, %p149
      %s151 = ssub.s32 %s26, %s38
      %s152 = ssub.s32 %s27, %s34
      %s153 = sor.u32 %s151, %s152
      %p154 = scmp.eq.s32.totalorder %s153, 0
      %s156 = sadd.s32 %s155, 1
      %s157 = scalar_select %p154, %s155, %s156
      %p160 = pneg %p154
      %p161 = scmp.eq.s32.totalorder %s19, 1
      %p162 = por %p160, %p161
      %p163 = scmp.ne.s32.totalorder %s155, %s158
      %p164 = scmp.eq.s32.totalorder %s19, 0
      %p165 = por %p163, %p164
      %p166 = scmp.ne.s32.totalorder %s155, %s158
      %p167 = scmp.eq.s32.totalorder %s24, 1
      %p168 = por %p166, %p167
      %p169 = scmp.ne.s32.totalorder %s158, %s159
      %p170 = scmp.eq.s32.totalorder %s24, 0
      %p171 = por %p169, %p170
      %p172 = scmp.ne.s32.totalorder %s158, %s159
      %p173 = scmp.eq.s32.totalorder %s25, 1
      %p174 = por %p172, %p173
      %p176 = scmp.ne.s32.totalorder %s159, %s175
      %p177 = scmp.eq.s32.totalorder %s25, 0
      %p178 = por %p176, %p177
      %p179 = scmp.le.s32.totalorder 1, %s19
      %p180 = scmp.lt.s32.totalorder %s19, 3
      %p181 = pnand %p179, %p180
      %p182 = pneg %p181
      // Predicated region
      $region9: #{tpu_custom_call.1} parent=5 // pred_check
        _
      $region10: #{tpu_custom_call.1} parent=5 // pred_check_branch
        %184 = sbr.rel (%p181) target = $region12
      $region11: #{tpu_custom_call.1} parent=5 // pred_region
        %s185 = ssub.s32 %s19, 1
        // Predicated region
        $region13: #{tpu_custom_call.1} parent=11 // pred_check
          %p186 = pneg %p80
        $region14: #{tpu_custom_call.1} parent=11 // pred_check_branch
          %188 = sbr.rel (%p186) target = $region16
        $region15: #{tpu_custom_call.1} parent=11 // pred_region
          %190 = vsyncadd [#allocation7], 0
          %s191 = sshll.u32 %s1, 4
          %s192 = int_to_ptr.hbm [resolvable:$true] %s191
          %s193 = sshll.u32 [#allocation6], 4
          %s194 = int_to_ptr.vmem [resolvable:$true] %s193
          %199 = dma.hbm_to_vmem [thread:$0]  %s192, 2048, %s194, [#allocation7], 128, 128, 8
        $region16: #{tpu_custom_call.1} parent=11 // pred_fallthru
          _
        // Predicated region
        $region17: #{tpu_custom_call.1} parent=11 // pred_check
          %p200 = pneg %p101
        $region18: #{tpu_custom_call.1} parent=11 // pred_check_branch
          %202 = sbr.rel (%p200) target = $region20
        $region19: #{tpu_custom_call.1} parent=11 // pred_region
          _
        $region20: #{tpu_custom_call.1} parent=11 // pred_fallthru
          _
        // Predicated region
        $region21: #{tpu_custom_call.1} parent=11 // pred_check
          %p203 = pneg %p122
        $region22: #{tpu_custom_call.1} parent=11 // pred_check_branch
          %205 = sbr.rel (%p203) target = $region24
        $region23: #{tpu_custom_call.1} parent=11 // pred_region
          %207 = vsyncadd [#allocation7], 0
          %s208 = sshll.u32 %s3, 4
          %s209 = int_to_ptr.hbm [resolvable:$true] %s208
          %s210 = sshll.u32 [#allocation8], 4
          %s211 = int_to_ptr.vmem [resolvable:$true] %s210
          %216 = dma.hbm_to_vmem [thread:$0]  %s209, 2048, %s211, [#allocation7], 128, 128, 8
        $region24: #{tpu_custom_call.1} parent=11 // pred_fallthru
          _
        // Predicated region
        $region25: #{tpu_custom_call.1} parent=11 // pred_check
          %p217 = pneg %p143
        $region26: #{tpu_custom_call.1} parent=11 // pred_check_branch
          %219 = sbr.rel (%p217) target = $region28
        $region27: #{tpu_custom_call.1} parent=11 // pred_region
          %221 = vsyncadd [#allocation10], 0
          %s223 = sshll.u32 %s4, 4
          %s224 = int_to_ptr.hbm [resolvable:$true] %s223
          %s225 = sshll.u32 [#allocation9], 4
          %s226 = int_to_ptr.vmem [resolvable:$true] %s225
          %228 = dma.hbm_to_vmem [thread:$0]  %s224, 128, %s226, [#allocation10]
        $region28: #{tpu_custom_call.1} parent=11 // pred_fallthru
          _
      $region12: #{tpu_custom_call.1} parent=5 // pred_fallthru
        _
      %p229 = scmp.lt.s32.totalorder %s19, 2
      // Predicated region
      $region29: #{tpu_custom_call.1} parent=5 // pred_check
        %p230 = pneg %p229
      $region30: #{tpu_custom_call.1} parent=5 // pred_check_branch
        %232 = sbr.rel (%p230) target = $region32
      $region31: #{tpu_custom_call.1} parent=5 // pred_region
        // Predicated region
        $region33: #{tpu_custom_call.1} parent=31 // pred_check
          %p233 = pneg %p53
        $region34: #{tpu_custom_call.1} parent=31 // pred_check_branch
          %235 = sbr.rel (%p233) target = $region36
        $region35: #{tpu_custom_call.1} parent=31 // pred_region
          %s236 = sand.u32 %s43, 1
          %s237 = scalar_lea.sflag [#allocation4], %s236
          %s238 = sand.u32 %s43, 1
          %s239 = smul.addr %s238, 32
          %s240 = scalar_lea.vmem [#allocation3], %s239
          %s241 = smul.u32 2, %s26
          %s242 = smul.u32 2, %s27
          %244 = vsyncadd %s237, 0
          %s245 = smul.addr %s241, 2
          %s246 = sadd.s32 %s242, %s245
          %s247 = smul.addr %s246, 8
          %s248 = scalar_lea.hbm %s0, %s247
          %s249 = sshll.u32 %s248, 4
          %s250 = int_to_ptr.hbm [resolvable:$true] %s249
          %s251 = sshll.u32 %s240, 4
          %s252 = int_to_ptr.vmem [resolvable:$true] %s251
          %257 = dma.hbm_to_vmem [thread:$0]  %s250, 512, %s252, %s237, 128, 128, 8
        $region36: #{tpu_custom_call.1} parent=31 // pred_fallthru
          _
      $region32: #{tpu_custom_call.1} parent=5 // pred_fallthru
        _
      %p258 = scmp.le.s32.totalorder 1, %s19
      %p259 = scmp.lt.s32.totalorder %s19, 3
      %p260 = pnand %p258, %p259
      %p261 = pneg %p260
      // Predicated region
      $region37: #{tpu_custom_call.1} parent=5 // pred_check
        _
      $region38: #{tpu_custom_call.1} parent=5 // pred_check_branch
        %263 = sbr.rel (%p260) target = $region40
      $region39: #{tpu_custom_call.1} parent=5 // pred_region
        %s264 = ssub.s32 %s19, 1
        %s265 = sand.u32 %s46, 1
        %s266 = scalar_lea.sflag [#allocation4], %s265
        %s267 = sand.u32 %s46, 1
        %s268 = smul.addr %s267, 32
        %s269 = scalar_lea.vmem [#allocation3], %s268
        // Predicated region
        $region41: #{tpu_custom_call.1} parent=39 // pred_check
          %p270 = pneg %p59
        $region42: #{tpu_custom_call.1} parent=39 // pred_check_branch
          %272 = sbr.rel (%p270) target = $region44
        $region43: #{tpu_custom_call.1} parent=39 // pred_region
          %274 = dma.done %s266, 512
        $region44: #{tpu_custom_call.1} parent=39 // pred_fallthru
          _
        // Predicated region
        $region45: #{tpu_custom_call.1} parent=39 // pred_check
          %p275 = pneg %p80
        $region46: #{tpu_custom_call.1} parent=39 // pred_check_branch
          %277 = sbr.rel (%p275) target = $region48
        $region47: #{tpu_custom_call.1} parent=39 // pred_region
          %279 = dma.done [#allocation7], 2048
        $region48: #{tpu_custom_call.1} parent=39 // pred_fallthru
          _
        // Predicated region
        $region49: #{tpu_custom_call.1} parent=39 // pred_check
          %p280 = pneg %p122
        $region50: #{tpu_custom_call.1} parent=39 // pred_check_branch
          %282 = sbr.rel (%p280) target = $region52
        $region51: #{tpu_custom_call.1} parent=39 // pred_region
          %284 = dma.done [#allocation7], 2048
        $region52: #{tpu_custom_call.1} parent=39 // pred_fallthru
          _
        // Predicated region
        $region53: #{tpu_custom_call.1} parent=39 // pred_check
          %p285 = pneg %p143
        $region54: #{tpu_custom_call.1} parent=39 // pred_check_branch
          %287 = sbr.rel (%p285) target = $region56
        $region55: #{tpu_custom_call.1} parent=39 // pred_region
          %289 = dma.done [#allocation10], 128
        $region56: #{tpu_custom_call.1} parent=39 // pred_fallthru
          _
        %s290 = sand.u32 %s46, 1
        %s291 = scalar_lea.sflag [#allocation4], %s290
        %s292 = sand.u32 %s46, 1
        %s293 = smul.addr %s292, 32
        %s294 = scalar_lea.vmem [#allocation3], %s293
        %p295 = pneg %p59
        %p296 = pneg %p56
        %p297 = pneg %p80
        %p298 = pneg %p77
        %p299 = pneg %p101
        %p300 = pneg %p98
        %p301 = pneg %p122
        %p302 = pneg %p119
        %p303 = pneg %p143
        %p304 = pneg %p140
        %p305 = pneg %p171
        %p306 = pneg %p168
        %s307 = sand.u32 %s158, 1
        %s308 = scalar_lea.sflag [#allocation5], %s307
        %s309 = sand.u32 %s158, 1
        %s310 = smul.addr %s309, 32
        %s311 = scalar_lea.vmem [#allocation11], %s310
        %s312 = smul.u32 2, %s28
        %s313 = smul.u32 2, %s29
        %s314 = smul.u32 2, %s28
        %s315 = smul.u32 2, %s29
        %v316 = vld [vmem:[%s269] sm:$0xff]
        %v317 = vld [vmem:[%s269 + $0x8] sm:$0xff]
        %v318 = vld [vmem:[%s269 + $0x10] sm:$0xff]
        %v319 = vld [vmem:[%s269 + $0x18] sm:$0xff]
        %v320 = vld [vmem:[#allocation6] sm:$0xff]
        %v321 = vld [vmem:[#allocation6 + $0x8] sm:$0xff]
        %v322 = vld [vmem:[#allocation6 + $0x10] sm:$0xff]
        %v323 = vld [vmem:[#allocation6 + $0x18] sm:$0xff]
        %v324 = vld [vmem:[#allocation6 + $0x20] sm:$0xff]
        %v325 = vld [vmem:[#allocation6 + $0x28] sm:$0xff]
        %v326 = vld [vmem:[#allocation6 + $0x30] sm:$0xff]
        %v327 = vld [vmem:[#allocation6 + $0x38] sm:$0xff]
        %v328 = vld [vmem:[#allocation6 + $0x40] sm:$0xff]
        %v329 = vld [vmem:[#allocation6 + $0x48] sm:$0xff]
        %v330 = vld [vmem:[#allocation6 + $0x50] sm:$0xff]
        %v331 = vld [vmem:[#allocation6 + $0x58] sm:$0xff]
        %v332 = vld [vmem:[#allocation6 + $0x60] sm:$0xff]
        %v333 = vld [vmem:[#allocation6 + $0x68] sm:$0xff]
        %v334 = vld [vmem:[#allocation6 + $0x70] sm:$0xff]
        %v335 = vld [vmem:[#allocation6 + $0x78] sm:$0xff]
        %v336 = vld [vmem:[%s2] sm:$0x1]
        %v338 = vperm.slane %v336, 0
        %340 = vmatpush.msra.mxu0 %v335
        %341 = vmatpush.msra.mxu0 %v334
        %342 = vmatpush.msra.mxu0 %v333
        %343 = vmatpush.msra.mxu0 %v332
        %344 = vmatpush.msra.mxu0 %v331
        %345 = vmatpush.msra.mxu0 %v330
        %346 = vmatpush.msra.mxu0 %v329
        %347 = vmatpush.msra.mxu0 %v328
        %348 = vmatpush.msra.mxu0 %v327
        %349 = vmatpush.msra.mxu0 %v326
        %350 = vmatpush.msra.mxu0 %v325
        %351 = vmatpush.msra.mxu0 %v324
        %352 = vmatpush.msra.mxu0 %v323
        %353 = vmatpush.msra.mxu0 %v322
        %354 = vmatpush.msra.mxu0 %v321
        %355 = vmatpush.msra.mxu0 %v320
        %356 = vmatmul.f32.gmra.mxu0 %v316
        %v357 = vpop.f32.mrf.mxu0
        %v358 = vadd.f32 %v338, %v357
        %359 = vmatmul.f32.gmra.mxu0 %v317
        %v360 = vpop.f32.mrf.mxu0
        %v361 = vadd.f32 %v338, %v360
        %362 = vmatmul.f32.gmra.mxu0 %v318
        %v363 = vpop.f32.mrf.mxu0
        %v364 = vadd.f32 %v338, %v363
        %365 = vmatmul.f32.gmra.mxu0 %v319
        %v366 = vpop.f32.mrf.mxu0
        %v367 = vadd.f32 %v338, %v366
        %368 = vdwg.mxu0
        %v369 = vmax.f32 %v358, 0.0
        %v370 = vmax.f32 %v361, 0.0
        %v371 = vmax.f32 %v364, 0.0
        %v372 = vmax.f32 %v367, 0.0
        %v373 = vld [vmem:[#allocation8] sm:$0xff]
        %v374 = vld [vmem:[#allocation8 + $0x8] sm:$0xff]
        %v375 = vld [vmem:[#allocation8 + $0x10] sm:$0xff]
        %v376 = vld [vmem:[#allocation8 + $0x18] sm:$0xff]
        %v377 = vld [vmem:[#allocation8 + $0x20] sm:$0xff]
        %v378 = vld [vmem:[#allocation8 + $0x28] sm:$0xff]
        %v379 = vld [vmem:[#allocation8 + $0x30] sm:$0xff]
        %v380 = vld [vmem:[#allocation8 + $0x38] sm:$0xff]
        %v381 = vld [vmem:[#allocation8 + $0x40] sm:$0xff]
        %v382 = vld [vmem:[#allocation8 + $0x48] sm:$0xff]
        %v383 = vld [vmem:[#allocation8 + $0x50] sm:$0xff]
        %v384 = vld [vmem:[#allocation8 + $0x58] sm:$0xff]
        %v385 = vld [vmem:[#allocation8 + $0x60] sm:$0xff]
        %v386 = vld [vmem:[#allocation8 + $0x68] sm:$0xff]
        %v387 = vld [vmem:[#allocation8 + $0x70] sm:$0xff]
        %v388 = vld [vmem:[#allocation8 + $0x78] sm:$0xff]
        %389 = vmatpush.msra.mxu0 %v388
        %390 = vmatpush.msra.mxu0 %v387
        %391 = vmatpush.msra.mxu0 %v386
        %392 = vmatpush.msra.mxu0 %v385
        %393 = vmatpush.msra.mxu0 %v384
        %394 = vmatpush.msra.mxu0 %v383
        %395 = vmatpush.msra.mxu0 %v382
        %396 = vmatpush.msra.mxu0 %v381
        %397 = vmatpush.msra.mxu0 %v380
        %398 = vmatpush.msra.mxu0 %v379
        %399 = vmatpush.msra.mxu0 %v378
        %400 = vmatpush.msra.mxu0 %v377
        %401 = vmatpush.msra.mxu0 %v376
        %402 = vmatpush.msra.mxu0 %v375
        %403 = vmatpush.msra.mxu0 %v374
        %404 = vmatpush.msra.mxu0 %v373
        %405 = vmatmul.f32.gmra.mxu0 %v369
        %v406 = vpop.f32.mrf.mxu0
        %v407 = vadd.f32 0.0, %v406
        %408 = vmatmul.f32.gmra.mxu0 %v370
        %v409 = vpop.f32.mrf.mxu0
        %v410 = vadd.f32 0.0, %v409
        %411 = vmatmul.f32.gmra.mxu0 %v371
        %v412 = vpop.f32.mrf.mxu0
        %v413 = vadd.f32 0.0, %v412
        %414 = vmatmul.f32.gmra.mxu0 %v372
        %v415 = vpop.f32.mrf.mxu0
        %v416 = vadd.f32 0.0, %v415
        %417 = vdwg.mxu0
        %v418 = vld [vmem:[#allocation9] sm:$0x1f]
        %v419 = vperm.slane %v418, 4
        %v420 = vmul.f32 %v407, %v419
        %v421 = vmul.f32 %v410, %v419
        %v422 = vmul.f32 %v413, %v419
        %v423 = vmul.f32 %v416, %v419
        %p424 = scmp.eq.s32.totalorder %s29, 0
        // Predicated region
        $region57: #{tpu_custom_call.1} parent=39 // pred_check
          %p425 = pneg %p424
        $region58: #{tpu_custom_call.1} parent=39 // pred_check_branch
          %427 = sbr.rel (%p425) target = $region60
        $region59: #{tpu_custom_call.1} parent=39 // pred_region
          %428 = vst [vmem:[#allocation2] sm:$0xff] 0.0
          %429 = vst [vmem:[#allocation2 + $0x8] sm:$0xff] 0.0
        $region60: #{tpu_custom_call.1} parent=39 // pred_fallthru
          _
        %v430 = vld [vmem:[#allocation2] sm:$0xff]
        %v431 = vld [vmem:[#allocation2 + $0x8] sm:$0xff]
        %v432 = vlaneseq
        %v433 = vshrl.u32 %v432, 7
        %v434 = vadd.s32 %v433, 8
        %v435 = vrot.slane %v407, 4
        %v436 = vrot.slane %v410, 4
        %v437 = vrot.slane %v413, 4
        %v438 = vrot.slane %v416, 4
        %vm439 = vcmp.lt.s32.totalorder %v433, 4
        %v440 = vsel %vm439, %v437, %v438
        %v441 = vsel %vm439, %v436, %v437
        %v442 = vsel %vm439, %v435, %v436
        %v443 = vsel %vm439, %v438, %v435
        %vm444 = vcmp.ge.s32.totalorder %v433, 4
        %vm445 = vcmp.ge.s32.totalorder %v434, 4
        %v446 = vsel %vm444, 1, 0
        %v447 = vsel %vm445, 1, 0
        %vm448 = vcmp.eq.s32.totalorder %v446, 1
        %vm449 = vcmp.eq.s32.totalorder %v447, 1
        %v450 = vsel %vm448, %v443, 0.0
        %v451 = vsel %vm449, %v442, 0.0
        %v452 = vsel %vm448, %v441, 0.0
        %v453 = vsel %vm449, %v440, 0.0
        %v454 = vperm.slane %v418, 0
        %v455 = vmul.f32 %v450, %v454
        %v456 = vmul.f32 %v451, %v454
        %v457 = vmul.f32 %v452, %v454
        %v458 = vmul.f32 %v453, %v454
        %v459 = vadd.f32 %v420, %v455
        %v460 = vadd.f32 %v421, %v456
        %v461 = vadd.f32 %v422, %v457
        %v462 = vadd.f32 %v423, %v458
        %v463 = vrot.slane %v430, 4
        %v464 = vrot.slane %v431, 4
        %v465 = vsel %vm439, %v463, %v464
        %v466 = vsel %vm439, %v464, %v463
        %v467 = vsel %vm439, 1, 0
        %vm468 = vcmp.eq.s32.totalorder %v467, 1
        %v469 = vsel %vm468, %v465, 0.0
        %v470 = vsel %vm468, %v466, 0.0
        %v471 = vmul.f32 %v469, %v454
        %v472 = vmul.f32 %v470, %v454
        %v473 = vadd.f32 %v471, 0.0
        %v474 = vadd.f32 %v472, 0.0
        %v475 = vrot.slane %v407, 5
        %v476 = vrot.slane %v410, 5
        %v477 = vrot.slane %v413, 5
        %v478 = vrot.slane %v416, 5
        %vm479 = vcmp.lt.s32.totalorder %v433, 3
        %v480 = vsel %vm479, %v477, %v478
        %v481 = vsel %vm479, %v476, %v477
        %v482 = vsel %vm479, %v475, %v476
        %v483 = vsel %vm479, %v478, %v475
        %vm484 = vcmp.ge.s32.totalorder %v433, 3
        %vm485 = vcmp.ge.s32.totalorder %v434, 3
        %v486 = vsel %vm484, 1, 0
        %v487 = vsel %vm485, 1, 0
        %vm488 = vcmp.eq.s32.totalorder %v486, 1
        %vm489 = vcmp.eq.s32.totalorder %v487, 1
        %v490 = vsel %vm488, %v483, 0.0
        %v491 = vsel %vm489, %v482, 0.0
        %v492 = vsel %vm488, %v481, 0.0
        %v493 = vsel %vm489, %v480, 0.0
        %v494 = vperm.slane %v418, 1
        %v495 = vmul.f32 %v490, %v494
        %v496 = vmul.f32 %v491, %v494
        %v497 = vmul.f32 %v492, %v494
        %v498 = vmul.f32 %v493, %v494
        %v499 = vadd.f32 %v459, %v495
        %v500 = vadd.f32 %v460, %v496
        %v501 = vadd.f32 %v461, %v497
        %v502 = vadd.f32 %v462, %v498
        %v503 = vrot.slane %v430, 5
        %v504 = vrot.slane %v431, 5
        %v505 = vsel %vm479, %v503, %v504
        %v506 = vsel %vm479, %v504, %v503
        %v507 = vsel %vm479, 1, 0
        %vm508 = vcmp.eq.s32.totalorder %v507, 1
        %v509 = vsel %vm508, %v505, 0.0
        %v510 = vsel %vm508, %v506, 0.0
        %v511 = vmul.f32 %v509, %v494
        %v512 = vmul.f32 %v510, %v494
        %v513 = vadd.f32 %v473, %v511
        %v514 = vadd.f32 %v474, %v512
        %v515 = vrot.slane %v407, 6
        %v516 = vrot.slane %v410, 6
        %v517 = vrot.slane %v413, 6
        %v518 = vrot.slane %v416, 6
        %vm519 = vcmp.lt.s32.totalorder %v433, 2
        %v520 = vsel %vm519, %v517, %v518
        %v521 = vsel %vm519, %v516, %v517
        %v522 = vsel %vm519, %v515, %v516
        %v523 = vsel %vm519, %v518, %v515
        %vm524 = vcmp.ge.s32.totalorder %v433, 2
        %vm525 = vcmp.ge.s32.totalorder %v434, 2
        %v526 = vsel %vm524, 1, 0
        %v527 = vsel %vm525, 1, 0
        %vm528 = vcmp.eq.s32.totalorder %v526, 1
        %vm529 = vcmp.eq.s32.totalorder %v527, 1
        %v530 = vsel %vm528, %v523, 0.0
        %v531 = vsel %vm529, %v522, 0.0
        %v532 = vsel %vm528, %v521, 0.0
        %v533 = vsel %vm529, %v520, 0.0
        %v534 = vperm.slane %v418, 2
        %v535 = vmul.f32 %v530, %v534
        %v536 = vmul.f32 %v531, %v534
        %v537 = vmul.f32 %v532, %v534
        %v538 = vmul.f32 %v533, %v534
        %v539 = vadd.f32 %v499, %v535
        %v540 = vadd.f32 %v500, %v536
        %v541 = vadd.f32 %v501, %v537
        %v542 = vadd.f32 %v502, %v538
        %v543 = vrot.slane %v430, 6
        %v544 = vrot.slane %v431, 6
        %v545 = vsel %vm519, %v543, %v544
        %v546 = vsel %vm519, %v544, %v543
        %v547 = vsel %vm519, 1, 0
        %vm548 = vcmp.eq.s32.totalorder %v547, 1
        %v549 = vsel %vm548, %v545, 0.0
        %v550 = vsel %vm548, %v546, 0.0
        %v551 = vmul.f32 %v549, %v534
        %v552 = vmul.f32 %v550, %v534
        %v553 = vadd.f32 %v513, %v551
        %v554 = vadd.f32 %v514, %v552
        %v555 = vrot.slane %v407, 7
        %v556 = vrot.slane %v410, 7
        %v557 = vrot.slane %v413, 7
        %v558 = vrot.slane %v416, 7
        %vm559 = vcmp.lt.s32.totalorder %v433, 1
        %v560 = vsel %vm559, %v557, %v558
        %v561 = vsel %vm559, %v556, %v557
        %v562 = vsel %vm559, %v555, %v556
        %v563 = vsel %vm559, %v558, %v555
        %vm564 = vcmp.ge.s32.totalorder %v433, 1
        %vm565 = vcmp.ge.s32.totalorder %v434, 1
        %v566 = vsel %vm564, 1, 0
        %v567 = vsel %vm565, 1, 0
        %vm568 = vcmp.eq.s32.totalorder %v566, 1
        %vm569 = vcmp.eq.s32.totalorder %v567, 1
        %v570 = vsel %vm568, %v563, 0.0
        %v571 = vsel %vm569, %v562, 0.0
        %v572 = vsel %vm568, %v561, 0.0
        %v573 = vsel %vm569, %v560, 0.0
        %v574 = vperm.slane %v418, 3
        %v575 = vmul.f32 %v570, %v574
        %v576 = vmul.f32 %v571, %v574
        %v577 = vmul.f32 %v572, %v574
        %v578 = vmul.f32 %v573, %v574
        %v579 = vadd.f32 %v539, %v575
        %v580 = vadd.f32 %v540, %v576
        %v581 = vadd.f32 %v541, %v577
        %v582 = vadd.f32 %v542, %v578
        %v583 = vrot.slane %v430, 7
        %v584 = vrot.slane %v431, 7
        %v585 = vsel %vm559, %v583, %v584
        %v586 = vsel %vm559, %v584, %v583
        %v587 = vsel %vm559, 1, 0
        %vm588 = vcmp.eq.s32.totalorder %v587, 1
        %v589 = vsel %vm588, %v585, 0.0
        %v590 = vsel %vm588, %v586, 0.0
        %v591 = vmul.f32 %v589, %v574
        %v592 = vmul.f32 %v590, %v574
        %v593 = vadd.f32 %v553, %v591
        %v594 = vadd.f32 %v554, %v592
        %595 = vst [vmem:[#allocation2] sm:$0xff] %v410
        %596 = vst [vmem:[#allocation2 + $0x8] sm:$0xff] %v416
        %v597 = vadd.f32 %v316, %v407
        %v598 = vadd.f32 %v317, %v410
        %v599 = vadd.f32 %v318, %v413
        %v600 = vadd.f32 %v319, %v416
        %v601 = vadd.f32 %v597, %v579
        %v602 = vadd.f32 %v598, %v580
        %v603 = vadd.f32 %v599, %v581
        %v604 = vadd.f32 %v600, %v582
        %605 = vst [vmem:[%s311] sm:$0xff] %v601
        %606 = vst [vmem:[%s311 + $0x8] sm:$0xff] %v602
        %607 = vst [vmem:[%s311 + $0x10] sm:$0xff] %v603
        %608 = vst [vmem:[%s311 + $0x18] sm:$0xff] %v604
        %v609 = vadd.f32 %v601, %v593
        %v610 = vadd.f32 %v603, %v594
        %611 = vst [vmem:[%s311] sm:$0xff] %v609
        %612 = vst [vmem:[%s311 + $0x10] sm:$0xff] %v610
        %s613 = sand.u32 %s158, 1
        %s614 = scalar_lea.sflag [#allocation5], %s613
        %s615 = sand.u32 %s158, 1
        %s616 = smul.addr %s615, 32
        %s617 = scalar_lea.vmem [#allocation11], %s616
        // Predicated region
        $region61: #{tpu_custom_call.1} parent=39 // pred_check
          %p618 = pneg %p168
        $region62: #{tpu_custom_call.1} parent=39 // pred_check_branch
          %620 = sbr.rel (%p618) target = $region64
        $region63: #{tpu_custom_call.1} parent=39 // pred_region
          %s621 = smul.u32 2, %s28
          %s622 = smul.u32 2, %s29
          %624 = vsyncadd %s614, 0
          %s625 = smul.addr %s621, 2
          %s626 = sadd.s32 %s622, %s625
          %s627 = smul.addr %s626, 8
          %s628 = scalar_lea.hbm %s5, %s627
          %s629 = sshll.u32 %s617, 4
          %s630 = int_to_ptr.vmem [resolvable:$true] %s629
          %s631 = sshll.u32 %s628, 4
          %s632 = int_to_ptr.hbm [resolvable:$true] %s631
          %637 = dma.vmem_to_hbm [thread:$0]  %s630, 512, %s632, %s614, 128, 128, 8
        $region64: #{tpu_custom_call.1} parent=39 // pred_fallthru
          _
      $region40: #{tpu_custom_call.1} parent=5 // pred_fallthru
        _
      %p638 = scmp.le.s32.totalorder 2, %s19
      // Predicated region
      $region65: #{tpu_custom_call.1} parent=5 // pred_check
        %p639 = pneg %p638
      $region66: #{tpu_custom_call.1} parent=5 // pred_check_branch
        %641 = sbr.rel (%p639) target = $region68
      $region67: #{tpu_custom_call.1} parent=5 // pred_region
        %s642 = ssub.s32 %s19, 2
        // Predicated region
        $region69: #{tpu_custom_call.1} parent=67 // pred_check
          %p643 = pneg %p174
        $region70: #{tpu_custom_call.1} parent=67 // pred_check_branch
          %645 = sbr.rel (%p643) target = $region72
        $region71: #{tpu_custom_call.1} parent=67 // pred_region
          %s646 = sand.u32 %s159, 1
          %s647 = scalar_lea.sflag [#allocation5], %s646
          %s648 = sand.u32 %s159, 1
          %s649 = smul.addr %s648, 32
          %s650 = scalar_lea.vmem [#allocation11], %s649
          %652 = dma.done %s647, 512
        $region72: #{tpu_custom_call.1} parent=67 // pred_fallthru
          _
      $region68: #{tpu_custom_call.1} parent=5 // pred_fallthru
        _
    $region6: #{tpu_custom_call.1} parent=1 // loop_footer
      %s23 = sadd.s32 1, %s19
    $region7: #{tpu_custom_call.1} parent=1 // loop_footer_branch
      %18 = sbr.rel target = $region3
    $region8: #{tpu_custom_call.1} parent=1 // loop_exit
      _
    %653 = vsyncpa [#allocation4], 1
    %s654 = scalar_lea.sflag [#allocation4], 1
    %655 = vsyncpa %s654, 1
    %656 = vsyncpa [#allocation7], 1
    %657 = vsyncpa [#allocation10], 1
    %658 = vsyncpa [#allocation5], 1
    %s659 = scalar_lea.sflag [#allocation5], 1
    %660 = vsyncpa %s659, 1

</llo_original>
